<compile_context>
chip_gen: v5e
topology: v5e:2x2
jax: 0.10.0
libtpu: 0.0.40
codegen_flags: <defaults>
</compile_context>

<pallas_src>
import jax
import jax.numpy as jnp
from jax.experimental import pallas as pl
from jax.experimental.pallas import tpu as pltpu

TRAIN_SIZE = 2      # batch
NCHANNELS = 9       # PARAMS.nchannels
RPIX = 16           # decompressed rows
CPIX = 16           # decompressed cols
HC = 8              # compressed rows  (x.shape[2])
WC = 8              # compressed cols  (x.shape[3])


def cloudmask_kernel(wb_ref, x_ref, lhs_bd_ref, rhs_ref, out_ref):
    """Single invocation; all operands fully resident in VMEM/SMEM.

      xw[b]   = sum_c w[c] * x[b, c]            (VPU tree-reduced channel fold)
      u       = stack_b(xw) @ rhs               (one MXU matmul, batched)
      d       = blockdiag(lhs, lhs) @ u         (one MXU matmul, batched)
      out[b]  = sigmoid(d[b*P:(b+1)*P] + bias)  (EUP + store)
    """
    B, C, H, W = x_ref.shape
    P = out_ref.shape[2]
    bias = wb_ref[C]                             # scalar bias (packed after w)

    xv = x_ref[...]                              # (B, C, H, W), single load

    # 1x1-conv channel reduction folded before decompression (linearity),
    # tree-reduced pairwise: depth ceil(log2(C)) instead of C-1 serial adds.
    terms = [wb_ref[c] * xv[:, c, :, :] for c in range(C)]   # each (B, H, W)
    while len(terms) > 1:
        nxt = [terms[i] + terms[i + 1] for i in range(0, len(terms) - 1, 2)]
        if len(terms) % 2:
            nxt.append(terms[-1])
        terms = nxt
    xw = terms[0]                                # (B, H, W)

    # Stack batch along the sublane axis; last dim unchanged -> layout-cheap.
    xw_stack = xw.reshape(B * H, W)              # (B*H, W)

    # Two MXU matmuls total for the whole call.
    u = jnp.dot(xw_stack, rhs_ref[...],
                preferred_element_type=jnp.float32)           # (B*H, Q)
    d_all = jnp.dot(lhs_bd_ref[...], u,
                    preferred_element_type=jnp.float32)       # (B*P, Q)

    probs = jax.nn.sigmoid(d_all + bias)         # EUP, whole batch at once

    for b in range(B):                           # B=2, fully unrolled, static slices
        out_ref[b, 0] = probs[b * P:(b + 1) * P, :].astype(out_ref.dtype)


def cloud_mask_compress(x, lhs, rhs, w, bias):
    """x: (B, 9, HC, WC) f32; lhs: (RPIX, HC); rhs: (WC, CPIX);
    w: (9,) 1x1-conv weights; bias: (1,).  Returns (B, 1, RPIX, CPIX) f32."""
    B, C, H, W = x.shape
    P, _ = lhs.shape
    _, Q = rhs.shape
    assert w.shape[0] == C, (w.shape, C)

    # Static-parameter preprocessing (one-time in production):
    #   * pack w and bias into one SMEM vector (fewer DMA descriptors),
    #   * block-diagonal lhs so the lhs-side matmul is batched over B.
    wb = jnp.concatenate([w, bias]).astype(jnp.float32)          # (C+1,)
    lhs_bd = jnp.kron(jnp.eye(B, dtype=lhs.dtype), lhs)          # (B*P, B*H)

    return pl.pallas_call(
        cloudmask_kernel,
        out_shape=jax.ShapeDtypeStruct((B, 1, P, Q), jnp.float32),
        grid_spec=pltpu.PrefetchScalarGridSpec(
            num_scalar_prefetch=0,
            grid=(1,),                                              # single step
            in_specs=[
                pl.BlockSpec(memory_space=pltpu.MemorySpace.SMEM),  # wb (C+1,)
                pl.BlockSpec((B, C, H, W), lambda i: (0, 0, 0, 0)), # x, whole array
                pl.BlockSpec((B * P, B * H), lambda i: (0, 0)),     # block-diag lhs
                pl.BlockSpec((W, Q), lambda i: (0, 0)),             # rhs
            ],
            out_specs=pl.BlockSpec((B, 1, P, Q), lambda i: (0, 0, 0, 0)),
        ),
        compiler_params=pltpu.CompilerParams(
            dimension_semantics=("arbitrary",)),
    )(wb, x, lhs_bd, rhs)


def reference(x, lhs, rhs, w, bias):
    d = jnp.einsum("ph,bchw,wq->bcpq", lhs, x, rhs)          # decompress per channel
    logits = jnp.einsum("bcpq,c->bpq", d, w) + bias[0]       # 1x1 conv head
    return jax.nn.sigmoid(logits)[:, None, :, :]


if __name__ == "__main__":
    key = jax.random.PRNGKey(0)
    kx, kl, kr, kw, kb = jax.random.split(key, 5)

    # Compressed input stack (9 "channels" = r,g,b,r1,g1,b1,r2,g2,b2).
    x = jax.random.normal(kx, (TRAIN_SIZE, NCHANNELS, HC, WC), dtype=jnp.float32)
    # Decompression projection matrices.
    lhs = jax.random.normal(kl, (RPIX, HC), dtype=jnp.float32) * 0.3
    rhs = jax.random.normal(kr, (WC, CPIX), dtype=jnp.float32) * 0.3
    # Deterministic "internal model" parameters (1x1 conv 9 -> 1, + bias).
    w = jax.random.normal(kw, (NCHANNELS,), dtype=jnp.float32) * 0.1
    bias = jax.random.normal(kb, (1,), dtype=jnp.float32) * 0.1

    out = cloud_mask_compress(x, lhs, rhs, w, bias)
    out = jax.block_until_ready(out)

    ref = reference(x, lhs, rhs, w, bias)
    assert out.shape == (TRAIN_SIZE, 1, RPIX, CPIX), out.shape
    assert jnp.allclose(out, ref, rtol=1e-5, atol=1e-5), float(jnp.max(jnp.abs(out - ref)))

    print("KERNEL_OK")
</pallas_src>

<mosaic_0001>
module attributes {stable_mosaic.version = 11 : i64} {
  func.func @cloudmask_kernel(%arg0: i32, %arg1: memref<10xf32, #tpu.memory_space<smem>>, %arg2: memref<2x9x8x8xf32, #tpu.memory_space<vmem>>, %arg3: memref<32x16xf32, #tpu.memory_space<vmem>>, %arg4: memref<8x16xf32, #tpu.memory_space<vmem>>, %arg5: memref<2x1x16x16xf32, #tpu.memory_space<vmem>>) attributes {dimension_semantics = [#tpu.dimension_semantics<arbitrary>], iteration_bounds = array<i64: 1>, scalar_prefetch = 0 : i64, scratch_operands = 0 : i64, tpu.core_type = #tpu.core_type<tc>, window_params = [{transform_indices = @transform_0, window_bounds = array<i64: 10>}, {pipeline_mode = #tpu.pipeline_mode<synchronous>, transform_indices = @transform_1, window_bounds = array<i64: 2, 9, 8, 8>}, {pipeline_mode = #tpu.pipeline_mode<synchronous>, transform_indices = @transform_2, window_bounds = array<i64: 32, 16>}, {pipeline_mode = #tpu.pipeline_mode<synchronous>, transform_indices = @transform_3, window_bounds = array<i64: 8, 16>}, {pipeline_mode = #tpu.pipeline_mode<synchronous>, transform_indices = @transform_4, window_bounds = array<i64: 2, 1, 16, 16>}]} {
    %c9 = arith.constant 9 : index
    %0 = memref.load %arg1[%c9] : memref<10xf32, #tpu.memory_space<smem>>
    %c0 = arith.constant 0 : index
    %c0_0 = arith.constant 0 : index
    %c0_1 = arith.constant 0 : index
    %c0_2 = arith.constant 0 : index
    %1 = vector.load %arg2[%c0, %c0_0, %c0_1, %c0_2] : memref<2x9x8x8xf32, #tpu.memory_space<vmem>>, vector<2x9x8x8xf32>
    %c0_3 = arith.constant 0 : index
    %2 = memref.load %arg1[%c0_3] : memref<10xf32, #tpu.memory_space<smem>>
    %3 = vector.extract_strided_slice %1 {offsets = [0, 0, 0, 0], sizes = [2, 1, 8, 8], strides = [1, 1, 1, 1]} : vector<2x9x8x8xf32> to vector<2x1x8x8xf32>
    %4 = vector.shape_cast %3 : vector<2x1x8x8xf32> to vector<2x8x8xf32>
    %5 = vector.broadcast %2 : f32 to vector<2x8x8xf32>
    %6 = arith.mulf %5, %4 : vector<2x8x8xf32>
    %c1 = arith.constant 1 : index
    %7 = memref.load %arg1[%c1] : memref<10xf32, #tpu.memory_space<smem>>
    %8 = vector.extract_strided_slice %1 {offsets = [0, 1, 0, 0], sizes = [2, 1, 8, 8], strides = [1, 1, 1, 1]} : vector<2x9x8x8xf32> to vector<2x1x8x8xf32>
    %9 = vector.shape_cast %8 : vector<2x1x8x8xf32> to vector<2x8x8xf32>
    %10 = vector.broadcast %7 : f32 to vector<2x8x8xf32>
    %11 = arith.mulf %10, %9 : vector<2x8x8xf32>
    %c2 = arith.constant 2 : index
    %12 = memref.load %arg1[%c2] : memref<10xf32, #tpu.memory_space<smem>>
    %13 = vector.extract_strided_slice %1 {offsets = [0, 2, 0, 0], sizes = [2, 1, 8, 8], strides = [1, 1, 1, 1]} : vector<2x9x8x8xf32> to vector<2x1x8x8xf32>
    %14 = vector.shape_cast %13 : vector<2x1x8x8xf32> to vector<2x8x8xf32>
    %15 = vector.broadcast %12 : f32 to vector<2x8x8xf32>
    %16 = arith.mulf %15, %14 : vector<2x8x8xf32>
    %c3 = arith.constant 3 : index
    %17 = memref.load %arg1[%c3] : memref<10xf32, #tpu.memory_space<smem>>
    %18 = vector.extract_strided_slice %1 {offsets = [0, 3, 0, 0], sizes = [2, 1, 8, 8], strides = [1, 1, 1, 1]} : vector<2x9x8x8xf32> to vector<2x1x8x8xf32>
    %19 = vector.shape_cast %18 : vector<2x1x8x8xf32> to vector<2x8x8xf32>
    %20 = vector.broadcast %17 : f32 to vector<2x8x8xf32>
    %21 = arith.mulf %20, %19 : vector<2x8x8xf32>
    %c4 = arith.constant 4 : index
    %22 = memref.load %arg1[%c4] : memref<10xf32, #tpu.memory_space<smem>>
    %23 = vector.extract_strided_slice %1 {offsets = [0, 4, 0, 0], sizes = [2, 1, 8, 8], strides = [1, 1, 1, 1]} : vector<2x9x8x8xf32> to vector<2x1x8x8xf32>
    %24 = vector.shape_cast %23 : vector<2x1x8x8xf32> to vector<2x8x8xf32>
    %25 = vector.broadcast %22 : f32 to vector<2x8x8xf32>
    %26 = arith.mulf %25, %24 : vector<2x8x8xf32>
    %c5 = arith.constant 5 : index
    %27 = memref.load %arg1[%c5] : memref<10xf32, #tpu.memory_space<smem>>
    %28 = vector.extract_strided_slice %1 {offsets = [0, 5, 0, 0], sizes = [2, 1, 8, 8], strides = [1, 1, 1, 1]} : vector<2x9x8x8xf32> to vector<2x1x8x8xf32>
    %29 = vector.shape_cast %28 : vector<2x1x8x8xf32> to vector<2x8x8xf32>
    %30 = vector.broadcast %27 : f32 to vector<2x8x8xf32>
    %31 = arith.mulf %30, %29 : vector<2x8x8xf32>
    %c6 = arith.constant 6 : index
    %32 = memref.load %arg1[%c6] : memref<10xf32, #tpu.memory_space<smem>>
    %33 = vector.extract_strided_slice %1 {offsets = [0, 6, 0, 0], sizes = [2, 1, 8, 8], strides = [1, 1, 1, 1]} : vector<2x9x8x8xf32> to vector<2x1x8x8xf32>
    %34 = vector.shape_cast %33 : vector<2x1x8x8xf32> to vector<2x8x8xf32>
    %35 = vector.broadcast %32 : f32 to vector<2x8x8xf32>
    %36 = arith.mulf %35, %34 : vector<2x8x8xf32>
    %c7 = arith.constant 7 : index
    %37 = memref.load %arg1[%c7] : memref<10xf32, #tpu.memory_space<smem>>
    %38 = vector.extract_strided_slice %1 {offsets = [0, 7, 0, 0], sizes = [2, 1, 8, 8], strides = [1, 1, 1, 1]} : vector<2x9x8x8xf32> to vector<2x1x8x8xf32>
    %39 = vector.shape_cast %38 : vector<2x1x8x8xf32> to vector<2x8x8xf32>
    %40 = vector.broadcast %37 : f32 to vector<2x8x8xf32>
    %41 = arith.mulf %40, %39 : vector<2x8x8xf32>
    %c8 = arith.constant 8 : index
    %42 = memref.load %arg1[%c8] : memref<10xf32, #tpu.memory_space<smem>>
    %43 = vector.extract_strided_slice %1 {offsets = [0, 8, 0, 0], sizes = [2, 1, 8, 8], strides = [1, 1, 1, 1]} : vector<2x9x8x8xf32> to vector<2x1x8x8xf32>
    %44 = vector.shape_cast %43 : vector<2x1x8x8xf32> to vector<2x8x8xf32>
    %45 = vector.broadcast %42 : f32 to vector<2x8x8xf32>
    %46 = arith.mulf %45, %44 : vector<2x8x8xf32>
    %47 = arith.addf %6, %11 : vector<2x8x8xf32>
    %48 = arith.addf %16, %21 : vector<2x8x8xf32>
    %49 = arith.addf %26, %31 : vector<2x8x8xf32>
    %50 = arith.addf %36, %41 : vector<2x8x8xf32>
    %51 = arith.addf %47, %48 : vector<2x8x8xf32>
    %52 = arith.addf %49, %50 : vector<2x8x8xf32>
    %53 = arith.addf %51, %52 : vector<2x8x8xf32>
    %54 = arith.addf %53, %46 : vector<2x8x8xf32>
    %55 = vector.shape_cast %54 : vector<2x8x8xf32> to vector<16x8xf32>
    %c0_4 = arith.constant 0 : index
    %c0_5 = arith.constant 0 : index
    %56 = vector.load %arg4[%c0_4, %c0_5] : memref<8x16xf32, #tpu.memory_space<vmem>>, vector<8x16xf32>
    %cst = arith.constant dense<0.000000e+00> : vector<16x16xf32>
    %57 = tpu.matmul %55, %56, %cst {dimension_numbers = #tpu.dot_dimension_numbers<[1], [0], [0], [1], [0, 0, 1, 1], [], []>} : vector<16x8xf32>, vector<8x16xf32>, vector<16x16xf32> -> vector<16x16xf32>
    %c0_6 = arith.constant 0 : index
    %c0_7 = arith.constant 0 : index
    %58 = vector.load %arg3[%c0_6, %c0_7] : memref<32x16xf32, #tpu.memory_space<vmem>>, vector<32x16xf32>
    %cst_8 = arith.constant dense<0.000000e+00> : vector<32x16xf32>
    %59 = tpu.matmul %58, %57, %cst_8 {dimension_numbers = #tpu.dot_dimension_numbers<[1], [0], [0], [1], [0, 0, 1, 1], [], []>} : vector<32x16xf32>, vector<16x16xf32>, vector<32x16xf32> -> vector<32x16xf32>
    %60 = vector.broadcast %0 : f32 to vector<32x16xf32>
    %61 = arith.addf %59, %60 : vector<32x16xf32>
    %62 = arith.negf %61 : vector<32x16xf32>
    %63 = math.exp %62 : vector<32x16xf32>
    %cst_9 = arith.constant 1.000000e+00 : f32
    %64 = vector.broadcast %cst_9 : f32 to vector<32x16xf32>
    %65 = arith.addf %64, %63 : vector<32x16xf32>
    %66 = arith.divf %64, %65 : vector<32x16xf32>
    %67 = vector.extract_strided_slice %66 {offsets = [0, 0], sizes = [16, 16], strides = [1, 1]} : vector<32x16xf32> to vector<16x16xf32>
    %c0_10 = arith.constant 0 : index
    %c0_11 = arith.constant 0 : index
    %c0_12 = arith.constant 0 : index
    %c0_13 = arith.constant 0 : index
    %68 = vector.load %arg5[%c0_10, %c0_11, %c0_12, %c0_13] : memref<2x1x16x16xf32, #tpu.memory_space<vmem>>, vector<1x1x16x16xf32>
    %69 = vector.shape_cast %68 : vector<1x1x16x16xf32> to vector<16x16xf32>
    %70 = vector.shape_cast %67 : vector<16x16xf32> to vector<1x1x16x16xf32>
    tpu.vector_store %arg5[%c0_10, %c0_11, %c0_12, %c0_13], %70 {strides = array<i32>} : memref<2x1x16x16xf32, #tpu.memory_space<vmem>>, vector<1x1x16x16xf32>,
    %71 = vector.extract_strided_slice %66 {offsets = [16, 0], sizes = [16, 16], strides = [1, 1]} : vector<32x16xf32> to vector<16x16xf32>
    %c1_14 = arith.constant 1 : index
    %c0_15 = arith.constant 0 : index
    %c0_16 = arith.constant 0 : index
    %c0_17 = arith.constant 0 : index
    %72 = vector.load %arg5[%c1_14, %c0_15, %c0_16, %c0_17] : memref<2x1x16x16xf32, #tpu.memory_space<vmem>>, vector<1x1x16x16xf32>
    %73 = vector.shape_cast %72 : vector<1x1x16x16xf32> to vector<16x16xf32>
    %74 = vector.shape_cast %71 : vector<16x16xf32> to vector<1x1x16x16xf32>
    tpu.vector_store %arg5[%c1_14, %c0_15, %c0_16, %c0_17], %74 {strides = array<i32>} : memref<2x1x16x16xf32, #tpu.memory_space<vmem>>, vector<1x1x16x16xf32>,
    return
  }
  func.func @transform_0(%arg0: i32) -> i32 {
    %c0_i32 = arith.constant 0 : i32
    %c0_i32_0 = arith.constant 0 : i32
    return %c0_i32 : i32
  }
  func.func @transform_1(%arg0: i32) -> (i32, i32, i32, i32) {
    %c0_i32 = arith.constant 0 : i32
    %c0_i32_0 = arith.constant 0 : i32
    %c0_i32_1 = arith.constant 0 : i32
    %c0_i32_2 = arith.constant 0 : i32
    %c0_i32_3 = arith.constant 0 : i32
    return %c0_i32, %c0_i32_0, %c0_i32_1, %c0_i32_2 : i32, i32, i32, i32
  }
  func.func @transform_2(%arg0: i32) -> (i32, i32) {
    %c0_i32 = arith.constant 0 : i32
    %c0_i32_0 = arith.constant 0 : i32
    %c0_i32_1 = arith.constant 0 : i32
    return %c0_i32, %c0_i32_0 : i32, i32
  }
  func.func @transform_3(%arg0: i32) -> (i32, i32) {
    %c0_i32 = arith.constant 0 : i32
    %c0_i32_0 = arith.constant 0 : i32
    %c0_i32_1 = arith.constant 0 : i32
    return %c0_i32, %c0_i32_0 : i32, i32
  }
  func.func @transform_4(%arg0: i32) -> (i32, i32, i32, i32) {
    %c0_i32 = arith.constant 0 : i32
    %c0_i32_0 = arith.constant 0 : i32
    %c0_i32_1 = arith.constant 0 : i32
    %c0_i32_2 = arith.constant 0 : i32
    %c0_i32_3 = arith.constant 0 : i32
    return %c0_i32, %c0_i32_0, %c0_i32_1, %c0_i32_2 : i32, i32, i32, i32
  }
}

</mosaic_0001>

<llo_original>
// kernel: tpu_custom_call.1
$region0: #{tpu_custom_call.1}
  #allocation0 [shape = 'u32[]', space=smem, size = 0x4, offset = 0x4, fixed_abs, tag = 'smem constant byte address 0x4 - core index']
  #allocation1 [shape = 'u32[72,128]{1,0:T(1,128)}', space=vmem, size = 0x9000, scoped, tag = 'internal scratch']
  %s0 = inlined_call_operand.vmem [shape: f32[10], index: 0, kind: input, shape index: {}]
  %s1 = inlined_call_operand.vmem [shape: f32[2,9,8,8], index: 1, kind: input, shape index: {}]
  %s2 = inlined_call_operand.vmem [shape: f32[32,16], index: 2, kind: input, shape index: {}]
  %s3 = inlined_call_operand.vmem [shape: f32[8,16], index: 3, kind: input, shape index: {}]
  %s4 = inlined_call_operand.hbm [shape: f32[2,1,16,16], index: 4, kind: output, shape index: {}]
  %s5 = sld [smem:[#allocation0]]
  $region30: #{tpu_custom_call.1} parent=0
    _
  %s7 = ssub.s32 1, %s5
  %s8 = scalar_select 0, %s7, %s5
  $region1: #{tpu_custom_call.1} parent=0
    #allocation2 [shape = 'u8[512]{0}', space=smem, size = 0x200, scoped, tag = 'input window, operand 0, single buffered']
    #allocation3 [shape = 's32[1]{0}', space=sflag, size = 0x4, scoped, tag = 'scoped memory for tpu_custom_call.1']
    #allocation4 [shape = 's32[1]{0}', space=sflag, size = 0x4, scoped, tag = 'scoped memory for tpu_custom_call.1']
    #allocation5 [shape = 'u8[16384]{0}', space=vmem, size = 0x4000, scoped, tag = 'output window, operand 0, single buffered']
    %9 = vsyncpa [#allocation4], 0
    %10 = vsyncpa [#allocation3], 0
    // Predicated region
    $region2: #{tpu_custom_call.1} parent=1 // pred_check
      _
    $region3: #{tpu_custom_call.1} parent=1 // pred_check_branch
      %12 = sbr.rel (0) target = $region5
    $region4: #{tpu_custom_call.1} parent=1 // pred_region
      %14 = vsyncadd [#allocation4], 0
      %s16 = sshll.u32 %s0, 4
      %s17 = int_to_ptr.vmem [resolvable:$true] %s16
      %19 = dma.vmem_to_smem %s17, 16, [#allocation2], [#allocation4]
    $region5: #{tpu_custom_call.1} parent=1 // pred_fallthru
      _
    // Predicated region
    $region6: #{tpu_custom_call.1} parent=1 // pred_check
      _
    $region7: #{tpu_custom_call.1} parent=1 // pred_check_branch
      %21 = sbr.rel (0) target = $region9
    $region8: #{tpu_custom_call.1} parent=1 // pred_region
      _
    $region9: #{tpu_custom_call.1} parent=1 // pred_fallthru
      _
    // Predicated region
    $region10: #{tpu_custom_call.1} parent=1 // pred_check
      _
    $region11: #{tpu_custom_call.1} parent=1 // pred_check_branch
      %23 = sbr.rel (0) target = $region13
    $region12: #{tpu_custom_call.1} parent=1 // pred_region
      _
    $region13: #{tpu_custom_call.1} parent=1 // pred_fallthru
      _
    // Predicated region
    $region14: #{tpu_custom_call.1} parent=1 // pred_check
      _
    $region15: #{tpu_custom_call.1} parent=1 // pred_check_branch
      %25 = sbr.rel (0) target = $region17
    $region16: #{tpu_custom_call.1} parent=1 // pred_region
      _
    $region17: #{tpu_custom_call.1} parent=1 // pred_fallthru
      _
    // Predicated region
    $region18: #{tpu_custom_call.1} parent=1 // pred_check
      _
    $region19: #{tpu_custom_call.1} parent=1 // pred_check_branch
      %27 = sbr.rel (0) target = $region21
    $region20: #{tpu_custom_call.1} parent=1 // pred_region
      %29 = dma.done [#allocation4], 16
    $region21: #{tpu_custom_call.1} parent=1 // pred_fallthru
      _
    %30 = sfence
    %s31 = sld [smem:[#allocation2 + $0x9]]
    %v32 = vld [vmem:[%s1] sm:$0xff]
    %v33 = vld [vmem:[%s1 + $0x8] sm:$0xff]
    %v34 = vld [vmem:[%s1 + $0x10] sm:$0xff]
    %v35 = vld [vmem:[%s1 + $0x18] sm:$0xff]
    %v36 = vld [vmem:[%s1 + $0x20] sm:$0xff]
    %v37 = vld [vmem:[%s1 + $0x28] sm:$0xff]
    %v38 = vld [vmem:[%s1 + $0x30] sm:$0xff]
    %v39 = vld [vmem:[%s1 + $0x38] sm:$0xff]
    %v40 = vld [vmem:[%s1 + $0x40] sm:$0xff]
    %v41 = vld [vmem:[%s1 + $0x48] sm:$0xff]
    %v42 = vld [vmem:[%s1 + $0x50] sm:$0xff]
    %v43 = vld [vmem:[%s1 + $0x58] sm:$0xff]
    %v44 = vld [vmem:[%s1 + $0x60] sm:$0xff]
    %v45 = vld [vmem:[%s1 + $0x68] sm:$0xff]
    %v46 = vld [vmem:[%s1 + $0x70] sm:$0xff]
    %v47 = vld [vmem:[%s1 + $0x78] sm:$0xff]
    %v48 = vld [vmem:[%s1 + $0x80] sm:$0xff]
    %v49 = vld [vmem:[%s1 + $0x88] sm:$0xff]
    %s50 = sld [smem:[#allocation2]]
    %v51 = vstv %s50
    %v52 = vmul.f32 %v51, %v32
    %v53 = vmul.f32 %v51, %v41
    %s54 = sld [smem:[#allocation2 + $0x1]]
    %v55 = vstv %s54
    %v56 = vmul.f32 %v55, %v33
    %v57 = vmul.f32 %v55, %v42
    %s58 = sld [smem:[#allocation2 + $0x2]]
    %v59 = vstv %s58
    %v60 = vmul.f32 %v59, %v34
    %v61 = vmul.f32 %v59, %v43
    %s62 = sld [smem:[#allocation2 + $0x3]]
    %v63 = vstv %s62
    %v64 = vmul.f32 %v63, %v35
    %v65 = vmul.f32 %v63, %v44
    %s66 = sld [smem:[#allocation2 + $0x4]]
    %v67 = vstv %s66
    %v68 = vmul.f32 %v67, %v36
    %v69 = vmul.f32 %v67, %v45
    %s70 = sld [smem:[#allocation2 + $0x5]]
    %v71 = vstv %s70
    %v72 = vmul.f32 %v71, %v37
    %v73 = vmul.f32 %v71, %v46
    %s74 = sld [smem:[#allocation2 + $0x6]]
    %v75 = vstv %s74
    %v76 = vmul.f32 %v75, %v38
    %v77 = vmul.f32 %v75, %v47
    %s78 = sld [smem:[#allocation2 + $0x7]]
    %v79 = vstv %s78
    %v80 = vmul.f32 %v79, %v39
    %v81 = vmul.f32 %v79, %v48
    %s82 = sld [smem:[#allocation2 + $0x8]]
    %v83 = vstv %s82
    %v84 = vmul.f32 %v83, %v40
    %v85 = vmul.f32 %v83, %v49
    %v86 = vadd.f32 %v52, %v56
    %v87 = vadd.f32 %v53, %v57
    %v88 = vadd.f32 %v60, %v64
    %v89 = vadd.f32 %v61, %v65
    %v90 = vadd.f32 %v68, %v72
    %v91 = vadd.f32 %v69, %v73
    %v92 = vadd.f32 %v76, %v80
    %v93 = vadd.f32 %v77, %v81
    %v94 = vadd.f32 %v86, %v88
    %v95 = vadd.f32 %v87, %v89
    %v96 = vadd.f32 %v90, %v92
    %v97 = vadd.f32 %v91, %v93
    %v98 = vadd.f32 %v94, %v96
    %v99 = vadd.f32 %v95, %v97
    %v100 = vadd.f32 %v98, %v84
    %v101 = vadd.f32 %v99, %v85
    %v102 = vld [vmem:[%s3] sm:$0xff]
    %vm103 = vcmask 64512
    %v105 = vsel %vm103, %v100, 0
    %v108 = vsel %vm103, %v101, 0
    %110 = vmatpush.msra.mxu0 0.0
    %111 = vmatpush.msra.mxu0 0.0
    %112 = vmatpush.msra.mxu0 0.0
    %113 = vmatpush.msra.mxu0 0.0
    %114 = vmatpush.msra.mxu0 0.0
    %115 = vmatpush.msra.mxu0 0.0
    %116 = vmatpush.msra.mxu0 0.0
    %117 = vmatpush.msra.mxu0 0.0
    %118 = vmatpush.msra.mxu0 0.0
    %119 = vmatpush.msra.mxu0 0.0
    %120 = vmatpush.msra.mxu0 0.0
    %121 = vmatpush.msra.mxu0 0.0
    %122 = vmatpush.msra.mxu0 0.0
    %123 = vmatpush.msra.mxu0 0.0
    %124 = vmatpush.msra.mxu0 0.0
    %125 = vmatpush.msra.mxu0 %v102
    %126 = vmatmul.f32.gmra.mxu0 %v105
    %v127 = vpop.f32.mrf.mxu0
    %v128 = vadd.f32 0.0, %v127
    %129 = vmatmul.f32.gmra.mxu0 %v108
    %v130 = vpop.f32.mrf.mxu0
    %v131 = vadd.f32 0.0, %v130
    %132 = vdwg.mxu0
    %v133 = vld [vmem:[%s2] sm:$0xff]
    %v134 = vld [vmem:[%s2 + $0x8] sm:$0xff]
    %v135 = vld [vmem:[%s2 + $0x10] sm:$0xff]
    %v136 = vld [vmem:[%s2 + $0x18] sm:$0xff]
    %v137 = vstv %s31
    %vm138 = vcmask 130048
    %v140 = vsel %vm138, %v133, 0
    %v143 = vsel %vm138, %v134, 0
    %v146 = vsel %vm138, %v135, 0
    %v149 = vsel %vm138, %v136, 0
    %151 = vmatpush.msra.mxu0 0.0
    %152 = vmatpush.msra.mxu0 0.0
    %153 = vmatpush.msra.mxu0 0.0
    %154 = vmatpush.msra.mxu0 0.0
    %155 = vmatpush.msra.mxu0 0.0
    %156 = vmatpush.msra.mxu0 0.0
    %157 = vmatpush.msra.mxu0 0.0
    %158 = vmatpush.msra.mxu0 0.0
    %159 = vmatpush.msra.mxu0 0.0
    %160 = vmatpush.msra.mxu0 0.0
    %161 = vmatpush.msra.mxu0 0.0
    %162 = vmatpush.msra.mxu0 0.0
    %163 = vmatpush.msra.mxu0 0.0
    %164 = vmatpush.msra.mxu0 0.0
    %165 = vmatpush.msra.mxu0 %v131
    %166 = vmatpush.msra.mxu0 %v128
    %167 = vmatmul.f32.gmra.mxu0 %v140
    %v168 = vpop.f32.mrf.mxu0
    %v169 = vadd.f32 %v137, %v168
    %170 = vmatmul.f32.gmra.mxu0 %v143
    %v171 = vpop.f32.mrf.mxu0
    %v172 = vadd.f32 %v137, %v171
    %173 = vmatmul.f32.gmra.mxu0 %v146
    %v174 = vpop.f32.mrf.mxu0
    %v175 = vadd.f32 %v137, %v174
    %176 = vmatmul.f32.gmra.mxu0 %v149
    %v177 = vpop.f32.mrf.mxu0
    %v178 = vadd.f32 %v137, %v177
    %179 = vdwg.mxu0
    %v180 = vxor.u32 %v169, 2147483648
    %v181 = vxor.u32 %v172, 2147483648
    %v182 = vxor.u32 %v175, 2147483648
    %v183 = vxor.u32 %v178, 2147483648
    %v184 = vmul.f32 %v180, 1.442695
    %v185 = vpow.pop %v184
    %v186 = vmul.f32 %v181, 1.442695
    %v187 = vpow.pop %v186
    %v188 = vmul.f32 %v182, 1.442695
    %v189 = vpow.pop %v188
    %v190 = vmul.f32 %v183, 1.442695
    %v191 = vpow.pop %v190
    %v192 = vadd.f32 %v185, 1.0
    %v193 = vadd.f32 %v187, 1.0
    %v194 = vadd.f32 %v189, 1.0
    %v195 = vadd.f32 %v191, 1.0
    %v196 = vrcp.pop %v192
    %v197 = vmul.f32 %v192, %v196
    %v198 = vsub.f32 1.0, %v197
    %v199 = vmul.f32 %v196, %v198
    %v200 = vadd.f32 %v196, %v199
    %vm201 = vweird.f32 %v192
    %vm202 = vweird.f32 %v196
    %vm203 = vmor %vm201, %vm202
    %v204 = vsel %vm203, %v196, %v200
    %v205 = vand.u32 2147483647, %v192
    %vm206 = vcmp.eq.f32.partialorder %v205, 8.507059e+37
    %v207 = vand.u32 %v192, 2147483648
    %v208 = vor.u32 1.1754944e-38, %v207
    %v209 = vsel %vm206, %v208, %v204
    %v210 = vmul.f32 1.0, %v209
    %v211 = vrcp.pop %v193
    %v212 = vmul.f32 %v193, %v211
    %v213 = vsub.f32 1.0, %v212
    %v214 = vmul.f32 %v211, %v213
    %v215 = vadd.f32 %v211, %v214
    %vm216 = vweird.f32 %v193
    %vm217 = vweird.f32 %v211
    %vm218 = vmor %vm216, %vm217
    %v219 = vsel %vm218, %v211, %v215
    %v220 = vand.u32 2147483647, %v193
    %vm221 = vcmp.eq.f32.partialorder %v220, 8.507059e+37
    %v222 = vand.u32 %v193, 2147483648
    %v223 = vor.u32 1.1754944e-38, %v222
    %v224 = vsel %vm221, %v223, %v219
    %v225 = vmul.f32 1.0, %v224
    %v226 = vrcp.pop %v194
    %v227 = vmul.f32 %v194, %v226
    %v228 = vsub.f32 1.0, %v227
    %v229 = vmul.f32 %v226, %v228
    %v230 = vadd.f32 %v226, %v229
    %vm231 = vweird.f32 %v194
    %vm232 = vweird.f32 %v226
    %vm233 = vmor %vm231, %vm232
    %v234 = vsel %vm233, %v226, %v230
    %v235 = vand.u32 2147483647, %v194
    %vm236 = vcmp.eq.f32.partialorder %v235, 8.507059e+37
    %v237 = vand.u32 %v194, 2147483648
    %v238 = vor.u32 1.1754944e-38, %v237
    %v239 = vsel %vm236, %v238, %v234
    %v240 = vmul.f32 1.0, %v239
    %v241 = vrcp.pop %v195
    %v242 = vmul.f32 %v195, %v241
    %v243 = vsub.f32 1.0, %v242
    %v244 = vmul.f32 %v241, %v243
    %v245 = vadd.f32 %v241, %v244
    %vm246 = vweird.f32 %v195
    %vm247 = vweird.f32 %v241
    %vm248 = vmor %vm246, %vm247
    %v249 = vsel %vm248, %v241, %v245
    %v250 = vand.u32 2147483647, %v195
    %vm251 = vcmp.eq.f32.partialorder %v250, 8.507059e+37
    %v252 = vand.u32 %v195, 2147483648
    %v253 = vor.u32 1.1754944e-38, %v252
    %v254 = vsel %vm251, %v253, %v249
    %v255 = vmul.f32 1.0, %v254
    %256 = vst.msk [vmem:[#allocation5] sm:$0xff] %vm138, %v210
    %257 = vst.msk [vmem:[#allocation5 + $0x8] sm:$0xff] %vm138, %v225
    %s258 = scalar_lea.vmem [#allocation5], 16
    %259 = vst.msk [vmem:[%s258] sm:$0xff] %vm138, %v240
    %260 = vst.msk [vmem:[%s258 + $0x8] sm:$0xff] %vm138, %v255
    // Predicated region
    $region22: #{tpu_custom_call.1} parent=1 // pred_check
      _
    $region23: #{tpu_custom_call.1} parent=1 // pred_check_branch
      %262 = sbr.rel (0) target = $region25
    $region24: #{tpu_custom_call.1} parent=1 // pred_region
      %264 = vsyncadd [#allocation3], 0
      %s265 = sshll.u32 [#allocation5], 4
      %s266 = int_to_ptr.vmem [resolvable:$true] %s265
      %s267 = sshll.u32 %s4, 4
      %s268 = int_to_ptr.hbm [resolvable:$true] %s267
      %273 = dma.vmem_to_hbm [thread:$0]  %s266, 512, %s268, [#allocation3], 128, 128, 8
    $region25: #{tpu_custom_call.1} parent=1 // pred_fallthru
      _
    // Predicated region
    $region26: #{tpu_custom_call.1} parent=1 // pred_check
      _
    $region27: #{tpu_custom_call.1} parent=1 // pred_check_branch
      %275 = sbr.rel (0) target = $region29
    $region28: #{tpu_custom_call.1} parent=1 // pred_region
      %277 = dma.done [#allocation3], 512
    $region29: #{tpu_custom_call.1} parent=1 // pred_fallthru
      _
    %278 = vsyncpa [#allocation3], 1
    %279 = vsyncpa [#allocation4], 1

</llo_original>
